<compile_context>
chip_gen: v5e
topology: v5e:2x2
jax: 0.10.0
libtpu: 0.0.40
codegen_flags: <defaults>
</compile_context>

<pallas_src>
import functools

import jax
import jax.numpy as jnp
from jax import lax
from jax.experimental import pallas as pl
from jax.experimental.pallas import tpu as pltpu

HIDDEN = 20
LANE_CHUNK = 512  # in-kernel lane (batch) chunk: per-layer activations stay in vregs


def _round_up(x, m):
    return ((x + m - 1) // m) * m


def actor_kernel(x_ref,
                 w1_ref, b1_ref,
                 w2_ref, b2_ref,
                 w3_ref, b3_ref,
                 w4_ref, b4_ref,
                 out_ref,
                 *, chunk, n_chunks):
    """One grid step: (TB, n_states) slab of states -> (1, TB) actions.

    Weights are PyTorch-layout (out, in); biases are (out, 1) columns.
    Intermediates are (20, chunk): features on sublanes, batch on lanes.
    """
    # Hoist all weight/bias loads out of the chunk loop (tiny, stay resident).
    w1 = w1_ref[...]
    b1 = b1_ref[...]
    w2 = w2_ref[...]
    b2 = b2_ref[...]
    w3 = w3_ref[...]
    b3 = b3_ref[...]
    w4 = w4_ref[...]
    b4 = b4_ref[0, 0]  # scalar final bias lives in SMEM

    def body(c, carry):
        start = pl.multiple_of(c * chunk, chunk)
        x = x_ref[pl.ds(start, chunk), :]                 # (chunk, n_states)

        # layer 1: contract n_states on both operands -> (20, chunk);
        # the batch<->feature reorientation happens on-chip.
        h = lax.dot_general(w1, x, (((1,), (1,)), ((), ())),
                            preferred_element_type=jnp.float32) + b1
        h = jnp.maximum(h, 0.0)

        # layer 2: Linear(20, 20) + ReLU
        h = jnp.dot(w2, h.astype(w2.dtype),
                    preferred_element_type=jnp.float32) + b2
        h = jnp.maximum(h, 0.0)

        # layer 3: Linear(20, 20) + ReLU
        h = jnp.dot(w3, h.astype(w3.dtype),
                    preferred_element_type=jnp.float32) + b3
        h = jnp.maximum(h, 0.0)

        # layer 4: Linear(20, 1), no activation
        y = jnp.dot(w4, h.astype(w4.dtype),
                    preferred_element_type=jnp.float32) + b4   # (1, chunk)

        out_ref[:, pl.ds(start, chunk)] = y.astype(out_ref.dtype)
        return carry

    lax.fori_loop(0, n_chunks, body, 0, unroll=True)


def actor_forward(state, params, *, max_tile=8192, compute_dtype=None):
    """state: (B, n_states) float32.  Returns (B, 1) float32.

    params: PyTorch-layout weights, w_i (out, in), b_i (out, 1) float32.
    max_tile: batch tile (multiple of 512; sweep 4096..32768 for large B).
    compute_dtype: optionally jnp.bfloat16 to halve the HBM read of `state`
      (accumulation stays f32; loosen tolerances accordingly).
    """
    B, n_states = state.shape
    w1, b1 = params["w1"], params["b1"]
    w2, b2 = params["w2"], params["b2"]
    w3, b3 = params["w3"], params["b3"]
    w4, b4 = params["w4"], params["b4"]

    if compute_dtype is not None:
        state = state.astype(compute_dtype)
        w1 = w1.astype(compute_dtype)
        w2 = w2.astype(compute_dtype)
        w3 = w3.astype(compute_dtype)
        w4 = w4.astype(compute_dtype)

    # Tile selection: TB is a multiple of 128 (of LANE_CHUNK when chunking).
    max_tile = max(LANE_CHUNK, _round_up(max_tile, LANE_CHUNK))
    if B <= LANE_CHUNK:
        TB = _round_up(B, 128)
        chunk = TB
    else:
        TB = min(max_tile, _round_up(B, LANE_CHUNK))
        chunk = LANE_CHUNK
    n_chunks = TB // chunk
    grid = (pl.cdiv(B, TB),)   # ragged last block: Pallas clips the output DMA

    # VMEM budget: ~2x double-buffered input block + 2x (8-sublane padded)
    # output block.  Raise the scoped limit only when needed; cap for v7x's
    # 64 MiB physical VMEM.
    itemsize = jnp.dtype(state.dtype).itemsize
    vmem_need = 2 * (TB * n_states * itemsize) + 2 * (8 * TB * 4) + (2 << 20)
    vmem_limit = None
    if vmem_need > (32 << 20):
        vmem_limit = min(int(vmem_need), 56 << 20)

    kernel = functools.partial(actor_kernel, chunk=chunk, n_chunks=n_chunks)

    in_specs = [
        # state block marches along the batch (sublane) axis, native layout
        pl.BlockSpec((TB, n_states), lambda i: (i, 0)),
        # weights/biases: full-array blocks, constant index_map -> VMEM-resident
        pl.BlockSpec(w1.shape, lambda i: (0, 0)),
        pl.BlockSpec(b1.shape, lambda i: (0, 0)),
        pl.BlockSpec(w2.shape, lambda i: (0, 0)),
        pl.BlockSpec(b2.shape, lambda i: (0, 0)),
        pl.BlockSpec(w3.shape, lambda i: (0, 0)),
        pl.BlockSpec(b3.shape, lambda i: (0, 0)),
        pl.BlockSpec(w4.shape, lambda i: (0, 0)),
        # scalar final bias -> SMEM (no padded VMEM tile / extra DMA buffers)
        pl.BlockSpec(memory_space=pltpu.MemorySpace.SMEM),
    ]
    out_spec = pl.BlockSpec((1, TB), lambda i: (0, i))   # lane-dense output slab

    out = pl.pallas_call(
        kernel,
        out_shape=jax.ShapeDtypeStruct((1, B), jnp.float32),
        grid=grid,
        in_specs=in_specs,
        out_specs=out_spec,
        compiler_params=pltpu.CompilerParams(
            dimension_semantics=("parallel",),   # megacore sharding on v7x
            vmem_limit_bytes=vmem_limit),
    )(state, w1, b1, w2, b2, w3, b3, w4, b4)

    # (1, B) -> (B, 1): free reshape, no transpose/copy.
    return out.reshape(B, 1)


def init_actor_params(key, n_states, hidden=HIDDEN):
    """PyTorch-style init; weights in PyTorch layout (out, in), biases (out, 1)."""
    keys = jax.random.split(key, 8)

    def lin(kw, kb, fan_in, fan_out):
        bound = 1.0 / jnp.sqrt(jnp.float32(fan_in))
        w = jax.random.uniform(kw, (fan_out, fan_in), jnp.float32, -bound, bound)
        b = jax.random.uniform(kb, (fan_out, 1), jnp.float32, -bound, bound)
        return w, b

    w1, b1 = lin(keys[0], keys[1], n_states, hidden)
    w2, b2 = lin(keys[2], keys[3], hidden, hidden)
    w3, b3 = lin(keys[4], keys[5], hidden, hidden)
    w4, b4 = lin(keys[6], keys[7], hidden, 1)
    return {"w1": w1, "b1": b1, "w2": w2, "b2": b2,
            "w3": w3, "b3": b3, "w4": w4, "b4": b4}


def actor_reference(state, params):
    """Pure-JAX reference (PyTorch semantics: y = x @ W.T + b)."""
    h = jnp.maximum(state @ params["w1"].T + params["b1"].T, 0.0)
    h = jnp.maximum(h @ params["w2"].T + params["b2"].T, 0.0)
    h = jnp.maximum(h @ params["w3"].T + params["b3"].T, 0.0)
    return h @ params["w4"].T + params["b4"].T


if __name__ == "__main__":
    key = jax.random.PRNGKey(0)
    k_params, k1, k2, k3 = jax.random.split(key, 4)

    n_states = 8  # small n_states consistent with the module's constructor arg
    params = init_actor_params(k_params, n_states)

    # Test 1: tiny batch (8) -> single block larger than the array, clipped output.
    s1 = jax.random.normal(k1, (8, n_states), jnp.float32)
    o1 = jax.block_until_ready(actor_forward(s1, params))
    r1 = actor_reference(s1, params)
    assert o1.shape == (8, 1), o1.shape
    assert jnp.allclose(o1, r1, atol=1e-5, rtol=1e-5)

    # Test 2: grid > 1 with a ragged last block (777 rows, TB forced to 512).
    s2 = jax.random.normal(k2, (777, n_states), jnp.float32)
    o2 = jax.block_until_ready(actor_forward(s2, params, max_tile=512))
    r2 = actor_reference(s2, params)
    assert o2.shape == (777, 1), o2.shape
    assert jnp.allclose(o2, r2, atol=1e-5, rtol=1e-5)

    # Test 3: multi-chunk in-kernel loop (TB=1536 -> 3 lane chunks), ragged tail.
    s3 = jax.random.normal(k3, (1200, n_states), jnp.float32)
    o3 = jax.block_until_ready(actor_forward(s3, params))
    r3 = actor_reference(s3, params)
    assert o3.shape == (1200, 1), o3.shape
    assert jnp.allclose(o3, r3, atol=1e-5, rtol=1e-5)

    print("KERNEL_OK")
</pallas_src>

<mosaic_0001>
module attributes {stable_mosaic.version = 11 : i64} {
  func.func @actor_kernel(%arg0: i32, %arg1: memref<128x8xf32, #tpu.memory_space<vmem>>, %arg2: memref<20x8xf32, #tpu.memory_space<vmem>>, %arg3: memref<20x1xf32, #tpu.memory_space<vmem>>, %arg4: memref<20x20xf32, #tpu.memory_space<vmem>>, %arg5: memref<20x1xf32, #tpu.memory_space<vmem>>, %arg6: memref<20x20xf32, #tpu.memory_space<vmem>>, %arg7: memref<20x1xf32, #tpu.memory_space<vmem>>, %arg8: memref<1x20xf32, #tpu.memory_space<vmem>>, %arg9: memref<1x1xf32, #tpu.memory_space<smem>>, %arg10: memref<1x128xf32, #tpu.memory_space<vmem>>) attributes {dimension_semantics = [#tpu.dimension_semantics<parallel>], iteration_bounds = array<i64: 1>, scalar_prefetch = 0 : i64, scratch_operands = 0 : i64, tpu.core_type = #tpu.core_type<tc>, window_params = [{transform_indices = @transform_0, window_bounds = array<i64: 128, 8>}, {pipeline_mode = #tpu.pipeline_mode<synchronous>, transform_indices = @transform_1, window_bounds = array<i64: 20, 8>}, {pipeline_mode = #tpu.pipeline_mode<synchronous>, transform_indices = @transform_2, window_bounds = array<i64: 20, 1>}, {pipeline_mode = #tpu.pipeline_mode<synchronous>, transform_indices = @transform_3, window_bounds = array<i64: 20, 20>}, {pipeline_mode = #tpu.pipeline_mode<synchronous>, transform_indices = @transform_4, window_bounds = array<i64: 20, 1>}, {pipeline_mode = #tpu.pipeline_mode<synchronous>, transform_indices = @transform_5, window_bounds = array<i64: 20, 20>}, {pipeline_mode = #tpu.pipeline_mode<synchronous>, transform_indices = @transform_6, window_bounds = array<i64: 20, 1>}, {pipeline_mode = #tpu.pipeline_mode<synchronous>, transform_indices = @transform_7, window_bounds = array<i64: 1, 20>}, {transform_indices = @transform_8, window_bounds = array<i64: 1, 1>}, {transform_indices = @transform_9, window_bounds = array<i64: 1, 128>}]} {
    %c0 = arith.constant 0 : index
    %c0_0 = arith.constant 0 : index
    %0 = vector.load %arg2[%c0, %c0_0] : memref<20x8xf32, #tpu.memory_space<vmem>>, vector<20x8xf32>
    %c0_1 = arith.constant 0 : index
    %c0_2 = arith.constant 0 : index
    %1 = vector.load %arg3[%c0_1, %c0_2] : memref<20x1xf32, #tpu.memory_space<vmem>>, vector<20x1xf32>
    %c0_3 = arith.constant 0 : index
    %c0_4 = arith.constant 0 : index
    %2 = vector.load %arg4[%c0_3, %c0_4] : memref<20x20xf32, #tpu.memory_space<vmem>>, vector<20x20xf32>
    %c0_5 = arith.constant 0 : index
    %c0_6 = arith.constant 0 : index
    %3 = vector.load %arg5[%c0_5, %c0_6] : memref<20x1xf32, #tpu.memory_space<vmem>>, vector<20x1xf32>
    %c0_7 = arith.constant 0 : index
    %c0_8 = arith.constant 0 : index
    %4 = vector.load %arg6[%c0_7, %c0_8] : memref<20x20xf32, #tpu.memory_space<vmem>>, vector<20x20xf32>
    %c0_9 = arith.constant 0 : index
    %c0_10 = arith.constant 0 : index
    %5 = vector.load %arg7[%c0_9, %c0_10] : memref<20x1xf32, #tpu.memory_space<vmem>>, vector<20x1xf32>
    %c0_11 = arith.constant 0 : index
    %c0_12 = arith.constant 0 : index
    %6 = vector.load %arg8[%c0_11, %c0_12] : memref<1x20xf32, #tpu.memory_space<vmem>>, vector<1x20xf32>
    %c0_13 = arith.constant 0 : index
    %c0_14 = arith.constant 0 : index
    %7 = memref.load %arg9[%c0_13, %c0_14] : memref<1x1xf32, #tpu.memory_space<smem>>
    %c0_i32 = arith.constant 0 : i32
    %c128_i32 = arith.constant 128 : i32
    %8 = arith.muli %c0_i32, %c128_i32 : i32
    %9 = tpu.assume_multiple %8, 128 : i32
    %10 = arith.index_cast %9 : i32 to index
    %c0_15 = arith.constant 0 : index
    %11 = vector.load %arg1[%10, %c0_15] : memref<128x8xf32, #tpu.memory_space<vmem>>, vector<128x8xf32>
    %cst = arith.constant dense<0.000000e+00> : vector<20x128xf32>
    %12 = tpu.matmul %0, %11, %cst {dimension_numbers = #tpu.dot_dimension_numbers<[1], [1], [0], [0], [0, 0, 1, 0], [], []>} : vector<20x8xf32>, vector<128x8xf32>, vector<20x128xf32> -> vector<20x128xf32>
    %13 = vector.broadcast %1 : vector<20x1xf32> to vector<20x128xf32>
    %14 = arith.addf %12, %13 : vector<20x128xf32>
    %cst_16 = arith.constant 0.000000e+00 : f32
    %15 = vector.broadcast %cst_16 : f32 to vector<20x128xf32>
    %16 = arith.maximumf %14, %15 : vector<20x128xf32>
    %cst_17 = arith.constant dense<0.000000e+00> : vector<20x128xf32>
    %17 = tpu.matmul %2, %16, %cst_17 {dimension_numbers = #tpu.dot_dimension_numbers<[1], [0], [0], [1], [0, 0, 1, 1], [], []>} : vector<20x20xf32>, vector<20x128xf32>, vector<20x128xf32> -> vector<20x128xf32>
    %18 = vector.broadcast %3 : vector<20x1xf32> to vector<20x128xf32>
    %19 = arith.addf %17, %18 : vector<20x128xf32>
    %cst_18 = arith.constant 0.000000e+00 : f32
    %20 = vector.broadcast %cst_18 : f32 to vector<20x128xf32>
    %21 = arith.maximumf %19, %20 : vector<20x128xf32>
    %cst_19 = arith.constant dense<0.000000e+00> : vector<20x128xf32>
    %22 = tpu.matmul %4, %21, %cst_19 {dimension_numbers = #tpu.dot_dimension_numbers<[1], [0], [0], [1], [0, 0, 1, 1], [], []>} : vector<20x20xf32>, vector<20x128xf32>, vector<20x128xf32> -> vector<20x128xf32>
    %23 = vector.broadcast %5 : vector<20x1xf32> to vector<20x128xf32>
    %24 = arith.addf %22, %23 : vector<20x128xf32>
    %cst_20 = arith.constant 0.000000e+00 : f32
    %25 = vector.broadcast %cst_20 : f32 to vector<20x128xf32>
    %26 = arith.maximumf %24, %25 : vector<20x128xf32>
    %cst_21 = arith.constant dense<0.000000e+00> : vector<1x128xf32>
    %27 = tpu.matmul %6, %26, %cst_21 {dimension_numbers = #tpu.dot_dimension_numbers<[1], [0], [0], [1], [0, 0, 1, 1], [], []>} : vector<1x20xf32>, vector<20x128xf32>, vector<1x128xf32> -> vector<1x128xf32>
    %28 = vector.broadcast %7 : f32 to vector<1x128xf32>
    %29 = arith.addf %27, %28 : vector<1x128xf32>
    %c0_22 = arith.constant 0 : index
    %30 = arith.index_cast %9 : i32 to index
    %31 = vector.load %arg10[%c0_22, %30] : memref<1x128xf32, #tpu.memory_space<vmem>>, vector<1x128xf32>
    tpu.vector_store %arg10[%c0_22, %30], %29 {strides = array<i32>} : memref<1x128xf32, #tpu.memory_space<vmem>>, vector<1x128xf32>,
    %c1_i32 = arith.constant 1 : i32
    return
  }
  func.func @transform_0(%arg0: i32) -> (i32, i32) {
    %c0_i32 = arith.constant 0 : i32
    %c0_i32_0 = arith.constant 0 : i32
    return %arg0, %c0_i32 : i32, i32
  }
  func.func @transform_1(%arg0: i32) -> (i32, i32) {
    %c0_i32 = arith.constant 0 : i32
    %c0_i32_0 = arith.constant 0 : i32
    %c0_i32_1 = arith.constant 0 : i32
    return %c0_i32, %c0_i32_0 : i32, i32
  }
  func.func @transform_2(%arg0: i32) -> (i32, i32) {
    %c0_i32 = arith.constant 0 : i32
    %c0_i32_0 = arith.constant 0 : i32
    %c0_i32_1 = arith.constant 0 : i32
    return %c0_i32, %c0_i32_0 : i32, i32
  }
  func.func @transform_3(%arg0: i32) -> (i32, i32) {
    %c0_i32 = arith.constant 0 : i32
    %c0_i32_0 = arith.constant 0 : i32
    %c0_i32_1 = arith.constant 0 : i32
    return %c0_i32, %c0_i32_0 : i32, i32
  }
  func.func @transform_4(%arg0: i32) -> (i32, i32) {
    %c0_i32 = arith.constant 0 : i32
    %c0_i32_0 = arith.constant 0 : i32
    %c0_i32_1 = arith.constant 0 : i32
    return %c0_i32, %c0_i32_0 : i32, i32
  }
  func.func @transform_5(%arg0: i32) -> (i32, i32) {
    %c0_i32 = arith.constant 0 : i32
    %c0_i32_0 = arith.constant 0 : i32
    %c0_i32_1 = arith.constant 0 : i32
    return %c0_i32, %c0_i32_0 : i32, i32
  }
  func.func @transform_6(%arg0: i32) -> (i32, i32) {
    %c0_i32 = arith.constant 0 : i32
    %c0_i32_0 = arith.constant 0 : i32
    %c0_i32_1 = arith.constant 0 : i32
    return %c0_i32, %c0_i32_0 : i32, i32
  }
  func.func @transform_7(%arg0: i32) -> (i32, i32) {
    %c0_i32 = arith.constant 0 : i32
    %c0_i32_0 = arith.constant 0 : i32
    %c0_i32_1 = arith.constant 0 : i32
    return %c0_i32, %c0_i32_0 : i32, i32
  }
  func.func @transform_8(%arg0: i32) -> (i32, i32) {
    %c0_i32 = arith.constant 0 : i32
    %c0_i32_0 = arith.constant 0 : i32
    %c0_i32_1 = arith.constant 0 : i32
    return %c0_i32, %c0_i32_0 : i32, i32
  }
  func.func @transform_9(%arg0: i32) -> (i32, i32) {
    %c0_i32 = arith.constant 0 : i32
    %c0_i32_0 = arith.constant 0 : i32
    return %c0_i32, %arg0 : i32, i32
  }
}

</mosaic_0001>

<llo_original>
// kernel: tpu_custom_call.1
$region0: #{tpu_custom_call.1}
  #allocation0 [shape = 'u32[]', space=smem, size = 0x4, offset = 0x4, fixed_abs, tag = 'smem constant byte address 0x4 - core index']
  #allocation1 [shape = 'u32[72,128]{1,0:T(1,128)}', space=vmem, size = 0x9000, scoped, tag = 'internal scratch']
  #allocation2 [shape = 'f32[1,1]{1,0:T(1,128)S(6)}', space=smem, size = 0x200, scoped, tag = 'scoped memory for tpu_custom_call.1']
  %s0 = inlined_call_operand.vmem [shape: f32[8,8], index: 0, kind: input, shape index: {}]
  %s1 = inlined_call_operand.vmem [shape: f32[20,8], index: 1, kind: input, shape index: {}]
  %s2 = inlined_call_operand.vmem [shape: f32[20,1], index: 2, kind: input, shape index: {}]
  %s3 = inlined_call_operand.vmem [shape: f32[20,20], index: 3, kind: input, shape index: {}]
  %s4 = inlined_call_operand.vmem [shape: f32[20,1], index: 4, kind: input, shape index: {}]
  %s5 = inlined_call_operand.vmem [shape: f32[20,20], index: 5, kind: input, shape index: {}]
  %s6 = inlined_call_operand.vmem [shape: f32[20,1], index: 6, kind: input, shape index: {}]
  %s7 = inlined_call_operand.vmem [shape: f32[1,20], index: 7, kind: input, shape index: {}]
  %s8 = inlined_call_operand.<no memory space> [shape: f32[1,1], index: 8, kind: input, shape index: {}]
  %s9 = inlined_call_operand.hbm [shape: f32[1,8], index: 9, kind: output, shape index: {}]
  %s10 = sld [smem:[#allocation0]]
  $region46: #{tpu_custom_call.1} parent=0
    _
  %s12 = ssub.s32 1, %s10
  %s13 = scalar_select 0, %s12, %s10
  %14 = sst [smem:[#allocation2]] %s8
  $region1: #{tpu_custom_call.1} parent=0
    #allocation3 [shape = 'u8[512]{0}', space=vmem, size = 0x400, scoped, tag = 'output window, operand 0, single buffered']
    #allocation4 [shape = 's32[1]{0}', space=sflag, size = 0x4, scoped, tag = 'scoped memory for tpu_custom_call.1']
    %15 = vsyncpa [#allocation4], 0
    // Predicated region
    $region2: #{tpu_custom_call.1} parent=1 // pred_check
      _
    $region3: #{tpu_custom_call.1} parent=1 // pred_check_branch
      %17 = sbr.rel (0) target = $region5
    $region4: #{tpu_custom_call.1} parent=1 // pred_region
      _
    $region5: #{tpu_custom_call.1} parent=1 // pred_fallthru
      _
    // Predicated region
    $region6: #{tpu_custom_call.1} parent=1 // pred_check
      _
    $region7: #{tpu_custom_call.1} parent=1 // pred_check_branch
      %19 = sbr.rel (0) target = $region9
    $region8: #{tpu_custom_call.1} parent=1 // pred_region
      _
    $region9: #{tpu_custom_call.1} parent=1 // pred_fallthru
      _
    // Predicated region
    $region10: #{tpu_custom_call.1} parent=1 // pred_check
      _
    $region11: #{tpu_custom_call.1} parent=1 // pred_check_branch
      %21 = sbr.rel (0) target = $region13
    $region12: #{tpu_custom_call.1} parent=1 // pred_region
      _
    $region13: #{tpu_custom_call.1} parent=1 // pred_fallthru
      _
    // Predicated region
    $region14: #{tpu_custom_call.1} parent=1 // pred_check
      _
    $region15: #{tpu_custom_call.1} parent=1 // pred_check_branch
      %23 = sbr.rel (0) target = $region17
    $region16: #{tpu_custom_call.1} parent=1 // pred_region
      _
    $region17: #{tpu_custom_call.1} parent=1 // pred_fallthru
      _
    // Predicated region
    $region18: #{tpu_custom_call.1} parent=1 // pred_check
      _
    $region19: #{tpu_custom_call.1} parent=1 // pred_check_branch
      %25 = sbr.rel (0) target = $region21
    $region20: #{tpu_custom_call.1} parent=1 // pred_region
      _
    $region21: #{tpu_custom_call.1} parent=1 // pred_fallthru
      _
    // Predicated region
    $region22: #{tpu_custom_call.1} parent=1 // pred_check
      _
    $region23: #{tpu_custom_call.1} parent=1 // pred_check_branch
      %27 = sbr.rel (0) target = $region25
    $region24: #{tpu_custom_call.1} parent=1 // pred_region
      _
    $region25: #{tpu_custom_call.1} parent=1 // pred_fallthru
      _
    // Predicated region
    $region26: #{tpu_custom_call.1} parent=1 // pred_check
      _
    $region27: #{tpu_custom_call.1} parent=1 // pred_check_branch
      %29 = sbr.rel (0) target = $region29
    $region28: #{tpu_custom_call.1} parent=1 // pred_region
      _
    $region29: #{tpu_custom_call.1} parent=1 // pred_fallthru
      _
    // Predicated region
    $region30: #{tpu_custom_call.1} parent=1 // pred_check
      _
    $region31: #{tpu_custom_call.1} parent=1 // pred_check_branch
      %31 = sbr.rel (0) target = $region33
    $region32: #{tpu_custom_call.1} parent=1 // pred_region
      _
    $region33: #{tpu_custom_call.1} parent=1 // pred_fallthru
      _
    // Predicated region
    $region34: #{tpu_custom_call.1} parent=1 // pred_check
      _
    $region35: #{tpu_custom_call.1} parent=1 // pred_check_branch
      %33 = sbr.rel (0) target = $region37
    $region36: #{tpu_custom_call.1} parent=1 // pred_region
      _
    $region37: #{tpu_custom_call.1} parent=1 // pred_fallthru
      _
    %v34 = vld [vmem:[%s1] sm:$0xff]
    %v35 = vld [vmem:[%s1 + $0x8] sm:$0xff]
    %v36 = vld [vmem:[%s1 + $0x10] sm:$0xf]
    %v37 = vld [vmem:[%s2] sm:$0xff]
    %v38 = vld [vmem:[%s2 + $0x8] sm:$0xff]
    %v39 = vld [vmem:[%s2 + $0x10] sm:$0xf]
    %v40 = vld [vmem:[%s3] sm:$0xff]
    %v41 = vld [vmem:[%s3 + $0x8] sm:$0xff]
    %v42 = vld [vmem:[%s3 + $0x10] sm:$0xf]
    %v43 = vld [vmem:[%s4] sm:$0xff]
    %v44 = vld [vmem:[%s4 + $0x8] sm:$0xff]
    %v45 = vld [vmem:[%s4 + $0x10] sm:$0xf]
    %v46 = vld [vmem:[%s5] sm:$0xff]
    %v47 = vld [vmem:[%s5 + $0x8] sm:$0xff]
    %v48 = vld [vmem:[%s5 + $0x10] sm:$0xf]
    %v49 = vld [vmem:[%s6] sm:$0xff]
    %v50 = vld [vmem:[%s6 + $0x8] sm:$0xff]
    %v51 = vld [vmem:[%s6 + $0x10] sm:$0xf]
    %v52 = vld [vmem:[%s7] sm:$0x1]
    %s53 = sld [smem:[#allocation2]]
    %v54 = vld [vmem:[%s0] sm:$0xff]
    %v55 = vld [vmem:[%s0 + $0x8] sm:$0xff]
    %v56 = vld [vmem:[%s0 + $0x10] sm:$0xff]
    %v57 = vld [vmem:[%s0 + $0x18] sm:$0xff]
    %v58 = vld [vmem:[%s0 + $0x20] sm:$0xff]
    %v59 = vld [vmem:[%s0 + $0x28] sm:$0xff]
    %v60 = vld [vmem:[%s0 + $0x30] sm:$0xff]
    %v61 = vld [vmem:[%s0 + $0x38] sm:$0xff]
    %v62 = vld [vmem:[%s0 + $0x40] sm:$0xff]
    %v63 = vld [vmem:[%s0 + $0x48] sm:$0xff]
    %v64 = vld [vmem:[%s0 + $0x50] sm:$0xff]
    %v65 = vld [vmem:[%s0 + $0x58] sm:$0xff]
    %v66 = vld [vmem:[%s0 + $0x60] sm:$0xff]
    %v67 = vld [vmem:[%s0 + $0x68] sm:$0xff]
    %v68 = vld [vmem:[%s0 + $0x70] sm:$0xff]
    %v69 = vld [vmem:[%s0 + $0x78] sm:$0xff]
    %71 = vset.pattern.permute.xlu0 0
    %72 = vperm.xlu0 %71, %v37
    %v73 = vpop.permute.xlu0 %72
    %76 = vset.pattern.permute.xlu0 0
    %77 = vperm.xlu0 %76, %v38
    %v78 = vpop.permute.xlu0 %77
    %81 = vset.pattern.permute.xlu0 0
    %82 = vperm.xlu0 %81, %v39
    %v83 = vpop.permute.xlu0 %82
    %vm85 = vcmask 64512
    %v87 = vsel %vm85, %v34, 0
    %v90 = vsel %vm85, %v35, 0
    %v93 = vsel %vm85, %v36, 0
    %v96 = vsel %vm85, %v54, 0
    %v99 = vsel %vm85, %v55, 0
    %v102 = vsel %vm85, %v56, 0
    %v105 = vsel %vm85, %v57, 0
    %v108 = vsel %vm85, %v58, 0
    %v111 = vsel %vm85, %v59, 0
    %v114 = vsel %vm85, %v60, 0
    %v117 = vsel %vm85, %v61, 0
    %v120 = vsel %vm85, %v62, 0
    %v123 = vsel %vm85, %v63, 0
    %v126 = vsel %vm85, %v64, 0
    %v129 = vsel %vm85, %v65, 0
    %v132 = vsel %vm85, %v66, 0
    %v135 = vsel %vm85, %v67, 0
    %v138 = vsel %vm85, %v68, 0
    %v141 = vsel %vm85, %v69, 0
    %143 = vmatpush.xpose.msra.mxu0 %v141
    %144 = vmatpush.xpose.msra.mxu0 %v138
    %145 = vmatpush.xpose.msra.mxu0 %v135
    %146 = vmatpush.xpose.msra.mxu0 %v132
    %147 = vmatpush.xpose.msra.mxu0 %v129
    %148 = vmatpush.xpose.msra.mxu0 %v126
    %149 = vmatpush.xpose.msra.mxu0 %v123
    %150 = vmatpush.xpose.msra.mxu0 %v120
    %151 = vmatpush.xpose.msra.mxu0 %v117
    %152 = vmatpush.xpose.msra.mxu0 %v114
    %153 = vmatpush.xpose.msra.mxu0 %v111
    %154 = vmatpush.xpose.msra.mxu0 %v108
    %155 = vmatpush.xpose.msra.mxu0 %v105
    %156 = vmatpush.xpose.msra.mxu0 %v102
    %157 = vmatpush.xpose.msra.mxu0 %v99
    %158 = vmatpush.xpose.msra.mxu0 %v96
    %159 = vmatmul.f32.gmra.mxu0 %v87
    %v160 = vpop.f32.mrf.mxu0
    %v161 = vadd.f32 %v73, %v160
    %162 = vmatmul.f32.gmra.mxu0 %v90
    %v163 = vpop.f32.mrf.mxu0
    %v164 = vadd.f32 %v78, %v163
    %165 = vmatmul.f32.gmra.mxu0 %v93
    %v166 = vpop.f32.mrf.mxu0
    %v167 = vadd.f32 %v83, %v166
    %168 = vdwg.mxu0
    %v169 = vmax.f32 %v161, 0.0
    %v170 = vmax.f32 %v164, 0.0
    %v171 = vmax.f32 %v167, 0.0
    %173 = vset.pattern.permute.xlu0 0
    %174 = vperm.xlu0 %173, %v43
    %v175 = vpop.permute.xlu0 %174
    %178 = vset.pattern.permute.xlu0 0
    %179 = vperm.xlu0 %178, %v44
    %v180 = vpop.permute.xlu0 %179
    %183 = vset.pattern.permute.xlu0 0
    %184 = vperm.xlu0 %183, %v45
    %v185 = vpop.permute.xlu0 %184
    %vm187 = vcmask 162816
    %v189 = vsel %vm187, %v40, 0
    %v192 = vsel %vm187, %v41, 0
    %v195 = vsel %vm187, %v42, 0
    %vm197 = vcmask 1043456
    %v199 = vsel %vm197, %v171, 0
    %201 = vmatpush.msra.mxu0 0.0
    %202 = vmatpush.msra.mxu0 0.0
    %203 = vmatpush.msra.mxu0 0.0
    %204 = vmatpush.msra.mxu0 0.0
    %205 = vmatpush.msra.mxu0 0.0
    %206 = vmatpush.msra.mxu0 0.0
    %207 = vmatpush.msra.mxu0 0.0
    %208 = vmatpush.msra.mxu0 0.0
    %209 = vmatpush.msra.mxu0 0.0
    %210 = vmatpush.msra.mxu0 0.0
    %211 = vmatpush.msra.mxu0 0.0
    %212 = vmatpush.msra.mxu0 0.0
    %213 = vmatpush.msra.mxu0 0.0
    %214 = vmatpush.msra.mxu0 %v199
    %215 = vmatpush.msra.mxu0 %v170
    %216 = vmatpush.msra.mxu0 %v169
    %217 = vmatmul.f32.gmra.mxu0 %v189
    %v218 = vpop.f32.mrf.mxu0
    %v219 = vadd.f32 %v175, %v218
    %220 = vmatmul.f32.gmra.mxu0 %v192
    %v221 = vpop.f32.mrf.mxu0
    %v222 = vadd.f32 %v180, %v221
    %223 = vmatmul.f32.gmra.mxu0 %v195
    %v224 = vpop.f32.mrf.mxu0
    %v225 = vadd.f32 %v185, %v224
    %226 = vdwg.mxu0
    %v227 = vmax.f32 %v219, 0.0
    %v228 = vmax.f32 %v222, 0.0
    %v229 = vmax.f32 %v225, 0.0
    %231 = vset.pattern.permute.xlu0 0
    %232 = vperm.xlu0 %231, %v49
    %v233 = vpop.permute.xlu0 %232
    %236 = vset.pattern.permute.xlu0 0
    %237 = vperm.xlu0 %236, %v50
    %v238 = vpop.permute.xlu0 %237
    %241 = vset.pattern.permute.xlu0 0
    %242 = vperm.xlu0 %241, %v51
    %v243 = vpop.permute.xlu0 %242
    %v246 = vsel %vm187, %v46, 0
    %v249 = vsel %vm187, %v47, 0
    %v252 = vsel %vm187, %v48, 0
    %v255 = vsel %vm197, %v229, 0
    %257 = vmatpush.msra.mxu0 0.0
    %258 = vmatpush.msra.mxu0 0.0
    %259 = vmatpush.msra.mxu0 0.0
    %260 = vmatpush.msra.mxu0 0.0
    %261 = vmatpush.msra.mxu0 0.0
    %262 = vmatpush.msra.mxu0 0.0
    %263 = vmatpush.msra.mxu0 0.0
    %264 = vmatpush.msra.mxu0 0.0
    %265 = vmatpush.msra.mxu0 0.0
    %266 = vmatpush.msra.mxu0 0.0
    %267 = vmatpush.msra.mxu0 0.0
    %268 = vmatpush.msra.mxu0 0.0
    %269 = vmatpush.msra.mxu0 0.0
    %270 = vmatpush.msra.mxu0 %v255
    %271 = vmatpush.msra.mxu0 %v228
    %272 = vmatpush.msra.mxu0 %v227
    %273 = vmatmul.f32.gmra.mxu0 %v246
    %v274 = vpop.f32.mrf.mxu0
    %v275 = vadd.f32 %v233, %v274
    %276 = vmatmul.f32.gmra.mxu0 %v249
    %v277 = vpop.f32.mrf.mxu0
    %v278 = vadd.f32 %v238, %v277
    %279 = vmatmul.f32.gmra.mxu0 %v252
    %v280 = vpop.f32.mrf.mxu0
    %v281 = vadd.f32 %v243, %v280
    %282 = vdwg.mxu0
    %v283 = vmax.f32 %v275, 0.0
    %v284 = vmax.f32 %v278, 0.0
    %v285 = vmax.f32 %v281, 0.0
    %v286 = vstv %s53
    %v288 = vsel %vm187, %v52, 0
    %v291 = vsel %vm197, %v285, 0
    %293 = vmatpush.msra.mxu0 0.0
    %294 = vmatpush.msra.mxu0 0.0
    %295 = vmatpush.msra.mxu0 0.0
    %296 = vmatpush.msra.mxu0 0.0
    %297 = vmatpush.msra.mxu0 0.0
    %298 = vmatpush.msra.mxu0 0.0
    %299 = vmatpush.msra.mxu0 0.0
    %300 = vmatpush.msra.mxu0 0.0
    %301 = vmatpush.msra.mxu0 0.0
    %302 = vmatpush.msra.mxu0 0.0
    %303 = vmatpush.msra.mxu0 0.0
    %304 = vmatpush.msra.mxu0 0.0
    %305 = vmatpush.msra.mxu0 0.0
    %306 = vmatpush.msra.mxu0 %v291
    %307 = vmatpush.msra.mxu0 %v284
    %308 = vmatpush.msra.mxu0 %v283
    %309 = vmatmul.f32.gmra.mxu0 %v288
    %v310 = vpop.f32.mrf.mxu0
    %v311 = vadd.f32 %v286, %v310
    %312 = vdwg.mxu0
    %313 = vst [vmem:[#allocation3] sm:$0x1] %v311
    // Predicated region
    $region38: #{tpu_custom_call.1} parent=1 // pred_check
      _
    $region39: #{tpu_custom_call.1} parent=1 // pred_check_branch
      %315 = sbr.rel (0) target = $region41
    $region40: #{tpu_custom_call.1} parent=1 // pred_region
      %317 = vsyncadd [#allocation4], 0
      %s319 = sshll.u32 [#allocation3], 4
      %s320 = int_to_ptr.vmem [resolvable:$true] %s319
      %s321 = sshll.u32 %s9, 4
      %s322 = int_to_ptr.hbm [resolvable:$true] %s321
      %324 = dma.vmem_to_hbm [thread:$0]  %s320, 16, %s322, [#allocation4]
    $region41: #{tpu_custom_call.1} parent=1 // pred_fallthru
      _
    // Predicated region
    $region42: #{tpu_custom_call.1} parent=1 // pred_check
      _
    $region43: #{tpu_custom_call.1} parent=1 // pred_check_branch
      %326 = sbr.rel (0) target = $region45
    $region44: #{tpu_custom_call.1} parent=1 // pred_region
      %328 = dma.done [#allocation4], 16
    $region45: #{tpu_custom_call.1} parent=1 // pred_fallthru
      _
    %329 = vsyncpa [#allocation4], 1

</llo_original>
